<compile_context>
chip_gen: v6e
topology: v6e:2x2x1
jax: 0.10.0
libtpu: 0.0.40
codegen_flags: <defaults>
</compile_context>

<pallas_src>
import jax
import jax.numpy as jnp
from jax import lax
from jax.experimental import pallas as pl
from jax.experimental.pallas import tpu as pltpu


# ----------------------------------------------------------------------------
# Kernel
# ----------------------------------------------------------------------------
def basic_block_kernel(x_ref, w1_ref, w2_ref, wskip_ref, bskip_ref,
                       s1_ref, t1_ref, s2_ref, t2_ref,
                       out_ref, xpad_scr, hpad_scr):
    # x_ref    : (bb, H, W*Cin)   row-flattened activations (f32)
    # w1_ref   : (3, W*Cin,  W*Cout)  banded row weights for conv1 (bf16)
    # w2_ref   : (3, W*Cout, W*Cout)  banded row weights for conv2 (bf16)
    # wskip_ref: (W*Cin, W*Cout)      block-diagonal 1x1-conv weight (bf16)
    # bskip_ref, s*_ref, t*_ref : (1, W*Cout) f32 (bias / folded BN scale,shift)
    # out_ref  : (bb, H, W*Cout)  lane-dense output
    # xpad_scr : VMEM (bb, H+2, W*Cin)  f32, H-padded input rows
    # hpad_scr : VMEM (bb, H+2, W*Cout) f32, H-padded conv1 output rows
    bb, H, WCin = x_ref.shape
    WCout = out_ref.shape[2]
    M = bb * H

    x = x_ref[...]                                        # (bb, H, W*Cin)

    # ---- in-kernel zero padding along H: zero only the two border rows.
    xpad_scr[:, 0:1, :] = jnp.zeros((bb, 1, WCin), jnp.float32)
    xpad_scr[:, H + 1:H + 2, :] = jnp.zeros((bb, 1, WCin), jnp.float32)
    xpad_scr[:, 1:H + 1, :] = x

    # ---- conv1: 3 row-taps, each (M, W*Cin) @ (W*Cin, W*Cout) on the MXU.
    acc = jnp.zeros((M, WCout), jnp.float32)
    for kh in range(3):
        lhs = xpad_scr[:, kh:kh + H, :].reshape(M, WCin).astype(jnp.bfloat16)
        acc = acc + jnp.dot(lhs, w1_ref[kh],
                            preferred_element_type=jnp.float32)

    # ---- bn1 (folded) + relu, in f32.
    h1 = jnp.maximum(acc * s1_ref[...] + t1_ref[...], 0.0)   # (M, W*Cout)

    # ---- conv2: pad h1 rows the same way, 3 matmuls with K = W*Cout.
    hpad_scr[:, 0:1, :] = jnp.zeros((bb, 1, WCout), jnp.float32)
    hpad_scr[:, H + 1:H + 2, :] = jnp.zeros((bb, 1, WCout), jnp.float32)
    hpad_scr[:, 1:H + 1, :] = h1.reshape(bb, H, WCout)

    acc2 = jnp.zeros((M, WCout), jnp.float32)
    for kh in range(3):
        lhs = hpad_scr[:, kh:kh + H, :].reshape(M, WCout).astype(jnp.bfloat16)
        acc2 = acc2 + jnp.dot(lhs, w2_ref[kh],
                              preferred_element_type=jnp.float32)
    h2 = acc2 * s2_ref[...] + t2_ref[...]                    # bn2 (folded)

    # ---- skip path: 1x1 conv with bias; reuses the loaded x block directly.
    skip = jnp.dot(x.reshape(M, WCin).astype(jnp.bfloat16), wskip_ref[...],
                   preferred_element_type=jnp.float32) + bskip_ref[...]

    # ---- add + relu, lane-dense store (last dim = W*Cout).
    out_ref[...] = jnp.maximum(h2 + skip, 0.0).reshape(bb, H, WCout)


# ----------------------------------------------------------------------------
# Wrapper: build row-structured weights, call the kernel, restore NCHW.
# ----------------------------------------------------------------------------
def _row_conv_weight(w_oihw, W):
    """(Cout, Cin, 3, 3) -> (3, W*Cin, W*Cout) banded matrices.

    out_row[h, w*Cout+co] = sum_kh (padded_in_row[h+kh-1] @ M[kh])[w*Cout+co]
    reproduces a 3x3 conv with padding=1 (W-direction padding is implicit in
    the band structure)."""
    Cout, Cin = w_oihw.shape[0], w_oihw.shape[1]
    w_hwio = jnp.transpose(w_oihw, (2, 3, 1, 0)).astype(jnp.float32)  # (3,3,Cin,Cout)
    mats = []
    for kh in range(3):
        m = jnp.zeros((W, Cin, W, Cout), jnp.float32)
        for kw in range(3):
            # S[w_in, w_out] = 1 iff w_in == w_out + kw - 1
            s = jnp.eye(W, dtype=jnp.float32, k=1 - kw)
            m = m + jnp.einsum('ab,io->aibo', s, w_hwio[kh, kw])
        mats.append(m.reshape(W * Cin, W * Cout))
    return jnp.stack(mats, axis=0)


def _row_skip_weight(wskip_oi11, W):
    """(Cout, Cin, 1, 1) -> (W*Cin, W*Cout) block-diagonal 1x1-conv weight."""
    wm = wskip_oi11[:, :, 0, 0].T.astype(jnp.float32)     # (Cin, Cout)
    m = jnp.einsum('ab,io->aibo', jnp.eye(W, dtype=jnp.float32), wm)
    return m.reshape(W * wm.shape[0], W * wm.shape[1])


def basic_block_2d(x_nchw, w1, w2, wskip, bskip, bn1_params, bn2_params,
                   eps=1e-5, batch_block=None):
    """x_nchw: (B, Cin, H, W); conv weights in PyTorch layout (Cout, Cin, kh, kw)."""
    B, Cin, H, W = x_nchw.shape
    Cout = w1.shape[0]
    WCin, WCout = W * Cin, W * Cout

    bb = B if batch_block is None else batch_block
    assert B % bb == 0, "batch block must divide batch"

    # NCHW -> (B, H, W*Cin): channels folded into the lane dimension.
    x2 = jnp.transpose(x_nchw, (0, 2, 3, 1)).reshape(B, H, WCin).astype(jnp.float32)

    # Row-structured conv / skip weights (bf16 for the MXU).
    w1row = _row_conv_weight(w1, W).astype(jnp.bfloat16)
    w2row = _row_conv_weight(w2, W).astype(jnp.bfloat16)
    wskiprow = _row_skip_weight(wskip, W).astype(jnp.bfloat16)
    bskiprow = jnp.tile(bskip.astype(jnp.float32), W).reshape(1, WCout)

    # Fold BatchNorm (inference) into per-(w, channel) scale/shift (f32).
    def fold(bn):
        g, b, m, v = bn
        s = g / jnp.sqrt(v + eps)
        t = b - m * s
        return (jnp.tile(s.astype(jnp.float32), W).reshape(1, WCout),
                jnp.tile(t.astype(jnp.float32), W).reshape(1, WCout))

    s1r, t1r = fold(bn1_params)
    s2r, t2r = fold(bn2_params)

    par_spec = pl.BlockSpec((1, WCout), lambda b: (0, 0))

    out2 = pl.pallas_call(
        basic_block_kernel,
        out_shape=jax.ShapeDtypeStruct((B, H, WCout), jnp.float32),
        grid_spec=pltpu.PrefetchScalarGridSpec(
            num_scalar_prefetch=0,
            grid=(B // bb,),
            in_specs=[
                pl.BlockSpec((bb, H, WCin), lambda b: (b, 0, 0)),
                pl.BlockSpec((3, WCin, WCout), lambda b: (0, 0, 0)),
                pl.BlockSpec((3, WCout, WCout), lambda b: (0, 0, 0)),
                pl.BlockSpec((WCin, WCout), lambda b: (0, 0)),
                par_spec,            # bskip
                par_spec, par_spec,  # s1, t1
                par_spec, par_spec,  # s2, t2
            ],
            out_specs=pl.BlockSpec((bb, H, WCout), lambda b: (b, 0, 0)),
            scratch_shapes=[
                pltpu.VMEM((bb, H + 2, WCin), jnp.float32),
                pltpu.VMEM((bb, H + 2, WCout), jnp.float32),
            ],
        ),
        compiler_params=pltpu.CompilerParams(
            dimension_semantics=("parallel",),
            # Explicit budget: safe on v7x's 64 MiB VMEM as well as v5e/v6e.
            vmem_limit_bytes=32 * 1024 * 1024,
        ),
    )(x2, w1row, w2row, wskiprow, bskiprow, s1r, t1r, s2r, t2r)

    # (B, H, W*Cout) -> (B, Cout, H, W)
    return jnp.transpose(out2.reshape(B, H, W, Cout), (0, 3, 1, 2))


# ----------------------------------------------------------------------------
# Plain-JAX reference matching the PyTorch forward (eval-mode BN).
# ----------------------------------------------------------------------------
def _reference(x_nchw, w1, w2, wskip, bskip, bn1, bn2, eps=1e-5):
    dn = ('NCHW', 'OIHW', 'NCHW')

    def conv(x, w, pad):
        return lax.conv_general_dilated(x, w, (1, 1),
                                        [(pad, pad), (pad, pad)],
                                        dimension_numbers=dn)

    def bn(y, p):
        g, b, m, v = p
        sh = (1, -1, 1, 1)
        return (y - m.reshape(sh)) / jnp.sqrt(v.reshape(sh) + eps) * \
            g.reshape(sh) + b.reshape(sh)

    out = jax.nn.relu(bn(conv(x_nchw, w1, 1), bn1))
    out = bn(conv(out, w2, 1), bn2)
    out = out + conv(x_nchw, wskip, 0) + bskip.reshape(1, -1, 1, 1)
    return jax.nn.relu(out)


if __name__ == "__main__":
    B, Cin, Cout, H, W = 2, 4, 8, 16, 16

    key = jax.random.PRNGKey(0)
    ks = jax.random.split(key, 10)
    x = jax.random.normal(ks[0], (B, Cin, H, W), jnp.float32)
    w1 = jax.random.normal(ks[1], (Cout, Cin, 3, 3), jnp.float32) * 0.1
    w2 = jax.random.normal(ks[2], (Cout, Cout, 3, 3), jnp.float32) * 0.1
    wskip = jax.random.normal(ks[3], (Cout, Cin, 1, 1), jnp.float32) * 0.1
    bskip = jax.random.normal(ks[4], (Cout,), jnp.float32) * 0.1

    def make_bn(k):
        k1, k2, k3, k4 = jax.random.split(k, 4)
        gamma = jax.random.uniform(k1, (Cout,), jnp.float32, 0.5, 1.5)
        beta = jax.random.normal(k2, (Cout,), jnp.float32) * 0.1
        mean = jax.random.normal(k3, (Cout,), jnp.float32) * 0.1
        var = jax.random.uniform(k4, (Cout,), jnp.float32, 0.5, 1.5)
        return (gamma, beta, mean, var)

    bn1 = make_bn(ks[5])
    bn2 = make_bn(ks[6])

    out = basic_block_2d(x, w1, w2, wskip, bskip, bn1, bn2)
    out = jax.block_until_ready(out)

    ref = _reference(x, w1, w2, wskip, bskip, bn1, bn2)
    assert out.shape == (B, Cout, H, W)
    # bf16 MXU operands with f32 accumulation -> allow ~5e-2 tolerance.
    assert jnp.allclose(out, ref, rtol=5e-2, atol=5e-2), \
        f"max err {jnp.max(jnp.abs(out - ref))}"
    print("KERNEL_OK")
</pallas_src>

<mosaic_0001>
module attributes {stable_mosaic.version = 11 : i64} {
  func.func @basic_block_kernel(%arg0: i32, %arg1: memref<2x16x64xf32, #tpu.memory_space<vmem>>, %arg2: memref<3x64x128xbf16, #tpu.memory_space<vmem>>, %arg3: memref<3x128x128xbf16, #tpu.memory_space<vmem>>, %arg4: memref<64x128xbf16, #tpu.memory_space<vmem>>, %arg5: memref<1x128xf32, #tpu.memory_space<vmem>>, %arg6: memref<1x128xf32, #tpu.memory_space<vmem>>, %arg7: memref<1x128xf32, #tpu.memory_space<vmem>>, %arg8: memref<1x128xf32, #tpu.memory_space<vmem>>, %arg9: memref<1x128xf32, #tpu.memory_space<vmem>>, %arg10: memref<2x16x128xf32, #tpu.memory_space<vmem>>, %arg11: memref<2x18x64xf32, #tpu.memory_space<vmem>>, %arg12: memref<2x18x128xf32, #tpu.memory_space<vmem>>) attributes {dimension_semantics = [#tpu.dimension_semantics<parallel>], iteration_bounds = array<i64: 1>, scalar_prefetch = 0 : i64, scratch_operands = 2 : i64, tpu.core_type = #tpu.core_type<tc>, window_params = [{transform_indices = @transform_0, window_bounds = array<i64: 2, 16, 64>}, {pipeline_mode = #tpu.pipeline_mode<synchronous>, transform_indices = @transform_1, window_bounds = array<i64: 3, 64, 128>}, {pipeline_mode = #tpu.pipeline_mode<synchronous>, transform_indices = @transform_2, window_bounds = array<i64: 3, 128, 128>}, {pipeline_mode = #tpu.pipeline_mode<synchronous>, transform_indices = @transform_3, window_bounds = array<i64: 64, 128>}, {pipeline_mode = #tpu.pipeline_mode<synchronous>, transform_indices = @transform_4, window_bounds = array<i64: 1, 128>}, {pipeline_mode = #tpu.pipeline_mode<synchronous>, transform_indices = @transform_5, window_bounds = array<i64: 1, 128>}, {pipeline_mode = #tpu.pipeline_mode<synchronous>, transform_indices = @transform_6, window_bounds = array<i64: 1, 128>}, {pipeline_mode = #tpu.pipeline_mode<synchronous>, transform_indices = @transform_7, window_bounds = array<i64: 1, 128>}, {pipeline_mode = #tpu.pipeline_mode<synchronous>, transform_indices = @transform_8, window_bounds = array<i64: 1, 128>}, {transform_indices = @transform_9, window_bounds = array<i64: 2, 16, 128>}]} {
    %c0 = arith.constant 0 : index
    %c0_0 = arith.constant 0 : index
    %c0_1 = arith.constant 0 : index
    %0 = vector.load %arg1[%c0, %c0_0, %c0_1] : memref<2x16x64xf32, #tpu.memory_space<vmem>>, vector<2x16x64xf32>
    %cst = arith.constant 0.000000e+00 : f32
    %1 = vector.broadcast %cst : f32 to vector<2x1x64xf32>
    %c0_2 = arith.constant 0 : index
    %c0_3 = arith.constant 0 : index
    %c0_4 = arith.constant 0 : index
    %2 = vector.load %arg11[%c0_2, %c0_3, %c0_4] : memref<2x18x64xf32, #tpu.memory_space<vmem>>, vector<2x1x64xf32>
    tpu.vector_store %arg11[%c0_2, %c0_3, %c0_4], %1 {strides = array<i32>} : memref<2x18x64xf32, #tpu.memory_space<vmem>>, vector<2x1x64xf32>,
    %cst_5 = arith.constant 0.000000e+00 : f32
    %3 = vector.broadcast %cst_5 : f32 to vector<2x1x64xf32>
    %c0_6 = arith.constant 0 : index
    %c17 = arith.constant 17 : index
    %c0_7 = arith.constant 0 : index
    %4 = vector.load %arg11[%c0_6, %c17, %c0_7] : memref<2x18x64xf32, #tpu.memory_space<vmem>>, vector<2x1x64xf32>
    tpu.vector_store %arg11[%c0_6, %c17, %c0_7], %3 {strides = array<i32>} : memref<2x18x64xf32, #tpu.memory_space<vmem>>, vector<2x1x64xf32>,
    %c0_8 = arith.constant 0 : index
    %c1 = arith.constant 1 : index
    %c0_9 = arith.constant 0 : index
    %5 = vector.load %arg11[%c0_8, %c1, %c0_9] : memref<2x18x64xf32, #tpu.memory_space<vmem>>, vector<2x16x64xf32>
    tpu.vector_store %arg11[%c0_8, %c1, %c0_9], %0 {strides = array<i32>} : memref<2x18x64xf32, #tpu.memory_space<vmem>>, vector<2x16x64xf32>,
    %cst_10 = arith.constant 0.000000e+00 : f32
    %6 = vector.broadcast %cst_10 : f32 to vector<32x128xf32>
    %c0_11 = arith.constant 0 : index
    %c0_12 = arith.constant 0 : index
    %c0_13 = arith.constant 0 : index
    %7 = vector.load %arg11[%c0_11, %c0_12, %c0_13] : memref<2x18x64xf32, #tpu.memory_space<vmem>>, vector<2x16x64xf32>
    %8 = vector.shape_cast %7 : vector<2x16x64xf32> to vector<32x64xf32>
    %9 = arith.truncf %8 : vector<32x64xf32> to vector<32x64xbf16>
    %c0_14 = arith.constant 0 : index
    %c0_15 = arith.constant 0 : index
    %c0_16 = arith.constant 0 : index
    %10 = vector.load %arg2[%c0_14, %c0_15, %c0_16] : memref<3x64x128xbf16, #tpu.memory_space<vmem>>, vector<1x64x128xbf16>
    %11 = vector.shape_cast %10 : vector<1x64x128xbf16> to vector<64x128xbf16>
    %cst_17 = arith.constant dense<0.000000e+00> : vector<32x128xf32>
    %12 = tpu.matmul %9, %11, %cst_17 {dimension_numbers = #tpu.dot_dimension_numbers<[1], [0], [0], [1], [0, 0, 1, 1], [], []>} : vector<32x64xbf16>, vector<64x128xbf16>, vector<32x128xf32> -> vector<32x128xf32>
    %13 = arith.addf %6, %12 : vector<32x128xf32>
    %c0_18 = arith.constant 0 : index
    %c1_19 = arith.constant 1 : index
    %c0_20 = arith.constant 0 : index
    %14 = vector.load %arg11[%c0_18, %c1_19, %c0_20] : memref<2x18x64xf32, #tpu.memory_space<vmem>>, vector<2x16x64xf32>
    %15 = vector.shape_cast %14 : vector<2x16x64xf32> to vector<32x64xf32>
    %16 = arith.truncf %15 : vector<32x64xf32> to vector<32x64xbf16>
    %c1_21 = arith.constant 1 : index
    %c0_22 = arith.constant 0 : index
    %c0_23 = arith.constant 0 : index
    %17 = vector.load %arg2[%c1_21, %c0_22, %c0_23] : memref<3x64x128xbf16, #tpu.memory_space<vmem>>, vector<1x64x128xbf16>
    %18 = vector.shape_cast %17 : vector<1x64x128xbf16> to vector<64x128xbf16>
    %cst_24 = arith.constant dense<0.000000e+00> : vector<32x128xf32>
    %19 = tpu.matmul %16, %18, %cst_24 {dimension_numbers = #tpu.dot_dimension_numbers<[1], [0], [0], [1], [0, 0, 1, 1], [], []>} : vector<32x64xbf16>, vector<64x128xbf16>, vector<32x128xf32> -> vector<32x128xf32>
    %20 = arith.addf %13, %19 : vector<32x128xf32>
    %c0_25 = arith.constant 0 : index
    %c2 = arith.constant 2 : index
    %c0_26 = arith.constant 0 : index
    %21 = vector.load %arg11[%c0_25, %c2, %c0_26] : memref<2x18x64xf32, #tpu.memory_space<vmem>>, vector<2x16x64xf32>
    %22 = vector.shape_cast %21 : vector<2x16x64xf32> to vector<32x64xf32>
    %23 = arith.truncf %22 : vector<32x64xf32> to vector<32x64xbf16>
    %c2_27 = arith.constant 2 : index
    %c0_28 = arith.constant 0 : index
    %c0_29 = arith.constant 0 : index
    %24 = vector.load %arg2[%c2_27, %c0_28, %c0_29] : memref<3x64x128xbf16, #tpu.memory_space<vmem>>, vector<1x64x128xbf16>
    %25 = vector.shape_cast %24 : vector<1x64x128xbf16> to vector<64x128xbf16>
    %cst_30 = arith.constant dense<0.000000e+00> : vector<32x128xf32>
    %26 = tpu.matmul %23, %25, %cst_30 {dimension_numbers = #tpu.dot_dimension_numbers<[1], [0], [0], [1], [0, 0, 1, 1], [], []>} : vector<32x64xbf16>, vector<64x128xbf16>, vector<32x128xf32> -> vector<32x128xf32>
    %27 = arith.addf %20, %26 : vector<32x128xf32>
    %c0_31 = arith.constant 0 : index
    %c0_32 = arith.constant 0 : index
    %28 = vector.load %arg6[%c0_31, %c0_32] : memref<1x128xf32, #tpu.memory_space<vmem>>, vector<1x128xf32>
    %29 = vector.broadcast %28 : vector<1x128xf32> to vector<32x128xf32>
    %30 = arith.mulf %27, %29 : vector<32x128xf32>
    %c0_33 = arith.constant 0 : index
    %c0_34 = arith.constant 0 : index
    %31 = vector.load %arg7[%c0_33, %c0_34] : memref<1x128xf32, #tpu.memory_space<vmem>>, vector<1x128xf32>
    %32 = vector.broadcast %31 : vector<1x128xf32> to vector<32x128xf32>
    %33 = arith.addf %30, %32 : vector<32x128xf32>
    %cst_35 = arith.constant 0.000000e+00 : f32
    %34 = vector.broadcast %cst_35 : f32 to vector<32x128xf32>
    %35 = arith.maximumf %33, %34 : vector<32x128xf32>
    %cst_36 = arith.constant 0.000000e+00 : f32
    %36 = vector.broadcast %cst_36 : f32 to vector<2x1x128xf32>
    %c0_37 = arith.constant 0 : index
    %c0_38 = arith.constant 0 : index
    %c0_39 = arith.constant 0 : index
    %37 = vector.load %arg12[%c0_37, %c0_38, %c0_39] : memref<2x18x128xf32, #tpu.memory_space<vmem>>, vector<2x1x128xf32>
    tpu.vector_store %arg12[%c0_37, %c0_38, %c0_39], %36 {strides = array<i32>} : memref<2x18x128xf32, #tpu.memory_space<vmem>>, vector<2x1x128xf32>,
    %cst_40 = arith.constant 0.000000e+00 : f32
    %38 = vector.broadcast %cst_40 : f32 to vector<2x1x128xf32>
    %c0_41 = arith.constant 0 : index
    %c17_42 = arith.constant 17 : index
    %c0_43 = arith.constant 0 : index
    %39 = vector.load %arg12[%c0_41, %c17_42, %c0_43] : memref<2x18x128xf32, #tpu.memory_space<vmem>>, vector<2x1x128xf32>
    tpu.vector_store %arg12[%c0_41, %c17_42, %c0_43], %38 {strides = array<i32>} : memref<2x18x128xf32, #tpu.memory_space<vmem>>, vector<2x1x128xf32>,
    %40 = vector.shape_cast %35 : vector<32x128xf32> to vector<2x16x128xf32>
    %c0_44 = arith.constant 0 : index
    %c1_45 = arith.constant 1 : index
    %c0_46 = arith.constant 0 : index
    %41 = vector.load %arg12[%c0_44, %c1_45, %c0_46] : memref<2x18x128xf32, #tpu.memory_space<vmem>>, vector<2x16x128xf32>
    tpu.vector_store %arg12[%c0_44, %c1_45, %c0_46], %40 {strides = array<i32>} : memref<2x18x128xf32, #tpu.memory_space<vmem>>, vector<2x16x128xf32>,
    %cst_47 = arith.constant 0.000000e+00 : f32
    %42 = vector.broadcast %cst_47 : f32 to vector<32x128xf32>
    %c0_48 = arith.constant 0 : index
    %c0_49 = arith.constant 0 : index
    %c0_50 = arith.constant 0 : index
    %43 = vector.load %arg12[%c0_48, %c0_49, %c0_50] : memref<2x18x128xf32, #tpu.memory_space<vmem>>, vector<2x16x128xf32>
    %44 = vector.shape_cast %43 : vector<2x16x128xf32> to vector<32x128xf32>
    %45 = arith.truncf %44 : vector<32x128xf32> to vector<32x128xbf16>
    %c0_51 = arith.constant 0 : index
    %c0_52 = arith.constant 0 : index
    %c0_53 = arith.constant 0 : index
    %46 = vector.load %arg3[%c0_51, %c0_52, %c0_53] : memref<3x128x128xbf16, #tpu.memory_space<vmem>>, vector<1x128x128xbf16>
    %47 = vector.shape_cast %46 : vector<1x128x128xbf16> to vector<128x128xbf16>
    %cst_54 = arith.constant dense<0.000000e+00> : vector<32x128xf32>
    %48 = tpu.matmul %45, %47, %cst_54 {dimension_numbers = #tpu.dot_dimension_numbers<[1], [0], [0], [1], [0, 0, 1, 1], [], []>} : vector<32x128xbf16>, vector<128x128xbf16>, vector<32x128xf32> -> vector<32x128xf32>
    %49 = arith.addf %42, %48 : vector<32x128xf32>
    %c0_55 = arith.constant 0 : index
    %c1_56 = arith.constant 1 : index
    %c0_57 = arith.constant 0 : index
    %50 = vector.load %arg12[%c0_55, %c1_56, %c0_57] : memref<2x18x128xf32, #tpu.memory_space<vmem>>, vector<2x16x128xf32>
    %51 = vector.shape_cast %50 : vector<2x16x128xf32> to vector<32x128xf32>
    %52 = arith.truncf %51 : vector<32x128xf32> to vector<32x128xbf16>
    %c1_58 = arith.constant 1 : index
    %c0_59 = arith.constant 0 : index
    %c0_60 = arith.constant 0 : index
    %53 = vector.load %arg3[%c1_58, %c0_59, %c0_60] : memref<3x128x128xbf16, #tpu.memory_space<vmem>>, vector<1x128x128xbf16>
    %54 = vector.shape_cast %53 : vector<1x128x128xbf16> to vector<128x128xbf16>
    %cst_61 = arith.constant dense<0.000000e+00> : vector<32x128xf32>
    %55 = tpu.matmul %52, %54, %cst_61 {dimension_numbers = #tpu.dot_dimension_numbers<[1], [0], [0], [1], [0, 0, 1, 1], [], []>} : vector<32x128xbf16>, vector<128x128xbf16>, vector<32x128xf32> -> vector<32x128xf32>
    %56 = arith.addf %49, %55 : vector<32x128xf32>
    %c0_62 = arith.constant 0 : index
    %c2_63 = arith.constant 2 : index
    %c0_64 = arith.constant 0 : index
    %57 = vector.load %arg12[%c0_62, %c2_63, %c0_64] : memref<2x18x128xf32, #tpu.memory_space<vmem>>, vector<2x16x128xf32>
    %58 = vector.shape_cast %57 : vector<2x16x128xf32> to vector<32x128xf32>
    %59 = arith.truncf %58 : vector<32x128xf32> to vector<32x128xbf16>
    %c2_65 = arith.constant 2 : index
    %c0_66 = arith.constant 0 : index
    %c0_67 = arith.constant 0 : index
    %60 = vector.load %arg3[%c2_65, %c0_66, %c0_67] : memref<3x128x128xbf16, #tpu.memory_space<vmem>>, vector<1x128x128xbf16>
    %61 = vector.shape_cast %60 : vector<1x128x128xbf16> to vector<128x128xbf16>
    %cst_68 = arith.constant dense<0.000000e+00> : vector<32x128xf32>
    %62 = tpu.matmul %59, %61, %cst_68 {dimension_numbers = #tpu.dot_dimension_numbers<[1], [0], [0], [1], [0, 0, 1, 1], [], []>} : vector<32x128xbf16>, vector<128x128xbf16>, vector<32x128xf32> -> vector<32x128xf32>
    %63 = arith.addf %56, %62 : vector<32x128xf32>
    %c0_69 = arith.constant 0 : index
    %c0_70 = arith.constant 0 : index
    %64 = vector.load %arg8[%c0_69, %c0_70] : memref<1x128xf32, #tpu.memory_space<vmem>>, vector<1x128xf32>
    %65 = vector.broadcast %64 : vector<1x128xf32> to vector<32x128xf32>
    %66 = arith.mulf %63, %65 : vector<32x128xf32>
    %c0_71 = arith.constant 0 : index
    %c0_72 = arith.constant 0 : index
    %67 = vector.load %arg9[%c0_71, %c0_72] : memref<1x128xf32, #tpu.memory_space<vmem>>, vector<1x128xf32>
    %68 = vector.broadcast %67 : vector<1x128xf32> to vector<32x128xf32>
    %69 = arith.addf %66, %68 : vector<32x128xf32>
    %70 = vector.shape_cast %0 : vector<2x16x64xf32> to vector<32x64xf32>
    %71 = arith.truncf %70 : vector<32x64xf32> to vector<32x64xbf16>
    %c0_73 = arith.constant 0 : index
    %c0_74 = arith.constant 0 : index
    %72 = vector.load %arg4[%c0_73, %c0_74] : memref<64x128xbf16, #tpu.memory_space<vmem>>, vector<64x128xbf16>
    %cst_75 = arith.constant dense<0.000000e+00> : vector<32x128xf32>
    %73 = tpu.matmul %71, %72, %cst_75 {dimension_numbers = #tpu.dot_dimension_numbers<[1], [0], [0], [1], [0, 0, 1, 1], [], []>} : vector<32x64xbf16>, vector<64x128xbf16>, vector<32x128xf32> -> vector<32x128xf32>
    %c0_76 = arith.constant 0 : index
    %c0_77 = arith.constant 0 : index
    %74 = vector.load %arg5[%c0_76, %c0_77] : memref<1x128xf32, #tpu.memory_space<vmem>>, vector<1x128xf32>
    %75 = vector.broadcast %74 : vector<1x128xf32> to vector<32x128xf32>
    %76 = arith.addf %73, %75 : vector<32x128xf32>
    %77 = arith.addf %69, %76 : vector<32x128xf32>
    %cst_78 = arith.constant 0.000000e+00 : f32
    %78 = vector.broadcast %cst_78 : f32 to vector<32x128xf32>
    %79 = arith.maximumf %77, %78 : vector<32x128xf32>
    %80 = vector.shape_cast %79 : vector<32x128xf32> to vector<2x16x128xf32>
    %c0_79 = arith.constant 0 : index
    %c0_80 = arith.constant 0 : index
    %c0_81 = arith.constant 0 : index
    %81 = vector.load %arg10[%c0_79, %c0_80, %c0_81] : memref<2x16x128xf32, #tpu.memory_space<vmem>>, vector<2x16x128xf32>
    tpu.vector_store %arg10[%c0_79, %c0_80, %c0_81], %80 {strides = array<i32>} : memref<2x16x128xf32, #tpu.memory_space<vmem>>, vector<2x16x128xf32>,
    return
  }
  func.func @transform_0(%arg0: i32) -> (i32, i32, i32) {
    %c0_i32 = arith.constant 0 : i32
    %c0_i32_0 = arith.constant 0 : i32
    %c0_i32_1 = arith.constant 0 : i32
    return %arg0, %c0_i32, %c0_i32_0 : i32, i32, i32
  }
  func.func @transform_1(%arg0: i32) -> (i32, i32, i32) {
    %c0_i32 = arith.constant 0 : i32
    %c0_i32_0 = arith.constant 0 : i32
    %c0_i32_1 = arith.constant 0 : i32
    %c0_i32_2 = arith.constant 0 : i32
    return %c0_i32, %c0_i32_0, %c0_i32_1 : i32, i32, i32
  }
  func.func @transform_2(%arg0: i32) -> (i32, i32, i32) {
    %c0_i32 = arith.constant 0 : i32
    %c0_i32_0 = arith.constant 0 : i32
    %c0_i32_1 = arith.constant 0 : i32
    %c0_i32_2 = arith.constant 0 : i32
    return %c0_i32, %c0_i32_0, %c0_i32_1 : i32, i32, i32
  }
  func.func @transform_3(%arg0: i32) -> (i32, i32) {
    %c0_i32 = arith.constant 0 : i32
    %c0_i32_0 = arith.constant 0 : i32
    %c0_i32_1 = arith.constant 0 : i32
    return %c0_i32, %c0_i32_0 : i32, i32
  }
  func.func @transform_4(%arg0: i32) -> (i32, i32) {
    %c0_i32 = arith.constant 0 : i32
    %c0_i32_0 = arith.constant 0 : i32
    %c0_i32_1 = arith.constant 0 : i32
    return %c0_i32, %c0_i32_0 : i32, i32
  }
  func.func @transform_5(%arg0: i32) -> (i32, i32) {
    %c0_i32 = arith.constant 0 : i32
    %c0_i32_0 = arith.constant 0 : i32
    %c0_i32_1 = arith.constant 0 : i32
    return %c0_i32, %c0_i32_0 : i32, i32
  }
  func.func @transform_6(%arg0: i32) -> (i32, i32) {
    %c0_i32 = arith.constant 0 : i32
    %c0_i32_0 = arith.constant 0 : i32
    %c0_i32_1 = arith.constant 0 : i32
    return %c0_i32, %c0_i32_0 : i32, i32
  }
  func.func @transform_7(%arg0: i32) -> (i32, i32) {
    %c0_i32 = arith.constant 0 : i32
    %c0_i32_0 = arith.constant 0 : i32
    %c0_i32_1 = arith.constant 0 : i32
    return %c0_i32, %c0_i32_0 : i32, i32
  }
  func.func @transform_8(%arg0: i32) -> (i32, i32) {
    %c0_i32 = arith.constant 0 : i32
    %c0_i32_0 = arith.constant 0 : i32
    %c0_i32_1 = arith.constant 0 : i32
    return %c0_i32, %c0_i32_0 : i32, i32
  }
  func.func @transform_9(%arg0: i32) -> (i32, i32, i32) {
    %c0_i32 = arith.constant 0 : i32
    %c0_i32_0 = arith.constant 0 : i32
    %c0_i32_1 = arith.constant 0 : i32
    return %arg0, %c0_i32, %c0_i32_0 : i32, i32, i32
  }
}

</mosaic_0001>

<llo_original>
// kernel: tpu_custom_call.1
$region0: #{tpu_custom_call.1}
  #allocation0 [shape = 'u32[]', space=smem, size = 0x4, offset = 0x4, fixed_abs, tag = 'smem constant byte address 0x4 - core index']
  #allocation1 [shape = 'u32[144,128]{1,0:T(1,128)}', space=vmem, size = 0x12000, scoped, tag = 'internal scratch']
  #allocation2 [shape = 'f32[2,18,64]{2,1,0:T(8,128)}', space=vmem, size = 0x6000, scoped, tag = 'scratch operand']
  #allocation3 [shape = 'f32[2,18,128]{2,1,0:T(8,128)}', space=vmem, size = 0x6000, scoped, tag = 'scratch operand']
  %s0 = inlined_call_operand.hbm [shape: f32[2,16,64], index: 0, kind: input, shape index: {}]
  %s1 = inlined_call_operand.hbm [shape: bf16[3,64,128], index: 1, kind: input, shape index: {}]
  %s2 = inlined_call_operand.hbm [shape: bf16[3,128,128], index: 2, kind: input, shape index: {}]
  %s3 = inlined_call_operand.hbm [shape: bf16[64,128], index: 3, kind: input, shape index: {}]
  %s4 = inlined_call_operand.vmem [shape: f32[1,128], index: 4, kind: input, shape index: {}]
  %s5 = inlined_call_operand.vmem [shape: f32[1,128], index: 5, kind: input, shape index: {}]
  %s6 = inlined_call_operand.vmem [shape: f32[1,128], index: 6, kind: input, shape index: {}]
  %s7 = inlined_call_operand.vmem [shape: f32[1,128], index: 7, kind: input, shape index: {}]
  %s8 = inlined_call_operand.vmem [shape: f32[1,128], index: 8, kind: input, shape index: {}]
  %s9 = inlined_call_operand.hbm [shape: f32[2,16,128], index: 9, kind: output, shape index: {}]
  %s10 = sld [smem:[#allocation0]]
  $region62: #{tpu_custom_call.1} parent=0
    _
  %s12 = ssub.s32 1, %s10
  %s13 = scalar_select 0, %s12, %s10
  $region1: #{tpu_custom_call.1} parent=0
    #allocation4 [shape = 'u8[16384]{0}', space=vmem, size = 0x4000, scoped, tag = 'input window, operand 0, single buffered']
    #allocation5 [shape = 's32[1]{0}', space=sflag, size = 0x4, scoped, tag = 'scoped memory for tpu_custom_call.1']
    #allocation6 [shape = 's32[1]{0}', space=sflag, size = 0x4, scoped, tag = 'scoped memory for tpu_custom_call.1']
    #allocation7 [shape = 'u8[49152]{0}', space=vmem, size = 0xc000, scoped, tag = 'input window, operand 1, single buffered']
    #allocation8 [shape = 's32[1]{0}', space=sflag, size = 0x4, scoped, tag = 'scoped memory for tpu_custom_call.1']
    #allocation9 [shape = 'u8[98304]{0}', space=vmem, size = 0x18000, scoped, tag = 'input window, operand 2, single buffered']
    #allocation10 [shape = 'u8[16384]{0}', space=vmem, size = 0x4000, scoped, tag = 'input window, operand 3, single buffered']
    #allocation11 [shape = 's32[1]{0}', space=sflag, size = 0x4, scoped, tag = 'scoped memory for tpu_custom_call.1']
    #allocation12 [shape = 'u8[16384]{0}', space=vmem, size = 0x4000, scoped, tag = 'output window, operand 0, single buffered']
    %14 = vsyncpa [#allocation5], 0
    %15 = vsyncpa [#allocation8], 0
    %16 = vsyncpa [#allocation11], 0
    %17 = vsyncpa [#allocation6], 0
    // Predicated region
    $region2: #{tpu_custom_call.1} parent=1 // pred_check
      _
    $region3: #{tpu_custom_call.1} parent=1 // pred_check_branch
      %19 = sbr.rel (0) target = $region5
    $region4: #{tpu_custom_call.1} parent=1 // pred_region
      %s21 = ssub.s32 512, 512
      %22 = vsyncadd [#allocation5], %s21
      %s23 = sshll.u32 [#allocation4], 4
      %s24 = int_to_ptr.vmem [resolvable:$true] %s23
      %29 = dma.hbm_to_vmem [thread:$0]  %s0, 512, %s24, [#allocation5], 128, 128, 8
    $region5: #{tpu_custom_call.1} parent=1 // pred_fallthru
      _
    // Predicated region
    $region6: #{tpu_custom_call.1} parent=1 // pred_check
      _
    $region7: #{tpu_custom_call.1} parent=1 // pred_check_branch
      %31 = sbr.rel (0) target = $region9
    $region8: #{tpu_custom_call.1} parent=1 // pred_region
      %s33 = ssub.s32 1536, 1536
      %34 = vsyncadd [#allocation8], %s33
      %s35 = sshll.u32 [#allocation7], 4
      %s36 = int_to_ptr.vmem [resolvable:$true] %s35
      %41 = dma.hbm_to_vmem [thread:$0]  %s1, 1536, %s36, [#allocation8], 64, 64, 4
    $region9: #{tpu_custom_call.1} parent=1 // pred_fallthru
      _
    // Predicated region
    $region10: #{tpu_custom_call.1} parent=1 // pred_check
      _
    $region11: #{tpu_custom_call.1} parent=1 // pred_check_branch
      %43 = sbr.rel (0) target = $region13
    $region12: #{tpu_custom_call.1} parent=1 // pred_region
      %s45 = ssub.s32 3072, 3072
      %46 = vsyncadd [#allocation8], %s45
      %s47 = sshll.u32 [#allocation9], 4
      %s48 = int_to_ptr.vmem [resolvable:$true] %s47
      %53 = dma.hbm_to_vmem [thread:$0]  %s2, 3072, %s48, [#allocation8], 64, 64, 4
    $region13: #{tpu_custom_call.1} parent=1 // pred_fallthru
      _
    // Predicated region
    $region14: #{tpu_custom_call.1} parent=1 // pred_check
      _
    $region15: #{tpu_custom_call.1} parent=1 // pred_check_branch
      %55 = sbr.rel (0) target = $region17
    $region16: #{tpu_custom_call.1} parent=1 // pred_region
      %s57 = ssub.s32 512, 512
      %58 = vsyncadd [#allocation11], %s57
      %s59 = sshll.u32 [#allocation10], 4
      %s60 = int_to_ptr.vmem [resolvable:$true] %s59
      %65 = dma.hbm_to_vmem [thread:$0]  %s3, 512, %s60, [#allocation11], 64, 64, 4
    $region17: #{tpu_custom_call.1} parent=1 // pred_fallthru
      _
    // Predicated region
    $region18: #{tpu_custom_call.1} parent=1 // pred_check
      _
    $region19: #{tpu_custom_call.1} parent=1 // pred_check_branch
      %67 = sbr.rel (0) target = $region21
    $region20: #{tpu_custom_call.1} parent=1 // pred_region
      _
    $region21: #{tpu_custom_call.1} parent=1 // pred_fallthru
      _
    // Predicated region
    $region22: #{tpu_custom_call.1} parent=1 // pred_check
      _
    $region23: #{tpu_custom_call.1} parent=1 // pred_check_branch
      %69 = sbr.rel (0) target = $region25
    $region24: #{tpu_custom_call.1} parent=1 // pred_region
      _
    $region25: #{tpu_custom_call.1} parent=1 // pred_fallthru
      _
    // Predicated region
    $region26: #{tpu_custom_call.1} parent=1 // pred_check
      _
    $region27: #{tpu_custom_call.1} parent=1 // pred_check_branch
      %71 = sbr.rel (0) target = $region29
    $region28: #{tpu_custom_call.1} parent=1 // pred_region
      _
    $region29: #{tpu_custom_call.1} parent=1 // pred_fallthru
      _
    // Predicated region
    $region30: #{tpu_custom_call.1} parent=1 // pred_check
      _
    $region31: #{tpu_custom_call.1} parent=1 // pred_check_branch
      %73 = sbr.rel (0) target = $region33
    $region32: #{tpu_custom_call.1} parent=1 // pred_region
      _
    $region33: #{tpu_custom_call.1} parent=1 // pred_fallthru
      _
    // Predicated region
    $region34: #{tpu_custom_call.1} parent=1 // pred_check
      _
    $region35: #{tpu_custom_call.1} parent=1 // pred_check_branch
      %75 = sbr.rel (0) target = $region37
    $region36: #{tpu_custom_call.1} parent=1 // pred_region
      _
    $region37: #{tpu_custom_call.1} parent=1 // pred_fallthru
      _
    // Predicated region
    $region38: #{tpu_custom_call.1} parent=1 // pred_check
      _
    $region39: #{tpu_custom_call.1} parent=1 // pred_check_branch
      %77 = sbr.rel (0) target = $region41
    $region40: #{tpu_custom_call.1} parent=1 // pred_region
      %78 = dma.done [#allocation5], 512
    $region41: #{tpu_custom_call.1} parent=1 // pred_fallthru
      _
    // Predicated region
    $region42: #{tpu_custom_call.1} parent=1 // pred_check
      _
    $region43: #{tpu_custom_call.1} parent=1 // pred_check_branch
      %80 = sbr.rel (0) target = $region45
    $region44: #{tpu_custom_call.1} parent=1 // pred_region
      %81 = dma.done [#allocation8], 1536
    $region45: #{tpu_custom_call.1} parent=1 // pred_fallthru
      _
    // Predicated region
    $region46: #{tpu_custom_call.1} parent=1 // pred_check
      _
    $region47: #{tpu_custom_call.1} parent=1 // pred_check_branch
      %83 = sbr.rel (0) target = $region49
    $region48: #{tpu_custom_call.1} parent=1 // pred_region
      %84 = dma.done [#allocation8], 3072
    $region49: #{tpu_custom_call.1} parent=1 // pred_fallthru
      _
    // Predicated region
    $region50: #{tpu_custom_call.1} parent=1 // pred_check
      _
    $region51: #{tpu_custom_call.1} parent=1 // pred_check_branch
      %86 = sbr.rel (0) target = $region53
    $region52: #{tpu_custom_call.1} parent=1 // pred_region
      %87 = dma.done [#allocation11], 512
    $region53: #{tpu_custom_call.1} parent=1 // pred_fallthru
      _
    %v89 = vld [vmem:[#allocation4] sm:$0xff]
    %v90 = vld [vmem:[#allocation4 + $0x8] sm:$0xff]
    %v91 = vld [vmem:[#allocation4 + $0x10] sm:$0xff]
    %v92 = vld [vmem:[#allocation4 + $0x18] sm:$0xff]
    %vm93 = vcmask 516096
    %94 = vst.msk [vmem:[#allocation2] sm:$0x1] %vm93, 0.0
    %95 = vst.msk [vmem:[#allocation2 + $0x18] sm:$0x1] %vm93, 0.0
    %96 = vst.msk [vmem:[#allocation2 + $0x11] sm:$0x1] %vm93, 0.0
    %97 = vst.msk [vmem:[#allocation2 + $0x29] sm:$0x1] %vm93, 0.0
    %vm98 = vcmask 523264
    %99 = vst.msk [vmem:[#allocation2 + $0x1] sm:$0xff] %vm98, %v89
    %100 = vst.msk [vmem:[#allocation2 + $0x9] sm:$0xff] %vm98, %v90
    %101 = vst.msk [vmem:[#allocation2 + $0x19] sm:$0xff] %vm98, %v91
    %102 = vst.msk [vmem:[#allocation2 + $0x21] sm:$0xff] %vm98, %v92
    %v103 = vld [vmem:[#allocation2] sm:$0xff]
    %v104 = vld [vmem:[#allocation2 + $0x8] sm:$0xff]
    %v105 = vld [vmem:[#allocation2 + $0x18] sm:$0xff]
    %v106 = vld [vmem:[#allocation2 + $0x20] sm:$0xff]
    %v107 = vpack.c.bf16 %v104, %v103
    %v108 = vpack.c.bf16 %v106, %v105
    %v109 = vld [vmem:[#allocation7] sm:$0xf]
    %v110 = vld [vmem:[#allocation7 + $0x4] sm:$0xf]
    %v111 = vld [vmem:[#allocation7 + $0x8] sm:$0xf]
    %v112 = vld [vmem:[#allocation7 + $0xc] sm:$0xf]
    %v113 = vld [vmem:[#allocation7 + $0x10] sm:$0xf]
    %v114 = vld [vmem:[#allocation7 + $0x14] sm:$0xf]
    %v115 = vld [vmem:[#allocation7 + $0x18] sm:$0xf]
    %v116 = vld [vmem:[#allocation7 + $0x1c] sm:$0xf]
    %v117 = vld [vmem:[#allocation2 + $0x1] sm:$0xff]
    %v118 = vld [vmem:[#allocation2 + $0x9] sm:$0xff]
    %v119 = vld [vmem:[#allocation2 + $0x19] sm:$0xff]
    %v120 = vld [vmem:[#allocation2 + $0x21] sm:$0xff]
    %v121 = vpack.c.bf16 %v118, %v117
    %v122 = vpack.c.bf16 %v120, %v119
    %s123 = scalar_lea.vmem [#allocation7], 32
    %v124 = vld [vmem:[%s123] sm:$0xf]
    %v125 = vld [vmem:[%s123 + $0x4] sm:$0xf]
    %v126 = vld [vmem:[%s123 + $0x8] sm:$0xf]
    %v127 = vld [vmem:[%s123 + $0xc] sm:$0xf]
    %v128 = vld [vmem:[%s123 + $0x10] sm:$0xf]
    %v129 = vld [vmem:[%s123 + $0x14] sm:$0xf]
    %v130 = vld [vmem:[%s123 + $0x18] sm:$0xf]
    %v131 = vld [vmem:[%s123 + $0x1c] sm:$0xf]
    %v140 = vunpack.c.l.b16 %v124
    %v141 = vunpack.c.l.b16 %v125
    %v142 = vunpack.c.l.b16 %v126
    %v143 = vunpack.c.l.b16 %v127
    %v144 = vunpack.c.l.b16 %v128
    %v145 = vunpack.c.l.b16 %v129
    %v146 = vunpack.c.l.b16 %v130
    %v147 = vunpack.c.l.b16 %v131
    %v148 = vpack.c.b16 %v141, %v140
    %v149 = vpack.c.b16 %v143, %v142
    %v150 = vpack.c.b16 %v145, %v144
    %v151 = vpack.c.b16 %v147, %v146
    %v157 = vsel %vm98, %v121, 0
    %v160 = vsel %vm98, %v122, 0
    %162 = vmatprep.subr.bf16.mxu0 0
    %163 = vmatpush1.bf16.msra.mxu0 0
    %164 = vmatprep.subr.bf16.mxu0 0
    %165 = vmatpush1.bf16.msra.mxu0 0
    %166 = vmatprep.subr.bf16.mxu0 0
    %167 = vmatpush1.bf16.msra.mxu0 0
    %168 = vmatprep.subr.bf16.mxu0 0
    %169 = vmatpush1.bf16.msra.mxu0 0
    %170 = vmatprep.subr.bf16.mxu0 0
    %171 = vmatpush1.bf16.msra.mxu0 %v151
    %172 = vmatprep.subr.bf16.mxu0 0
    %173 = vmatpush1.bf16.msra.mxu0 %v150
    %174 = vmatprep.subr.bf16.mxu0 0
    %175 = vmatpush1.bf16.msra.mxu0 %v149
    %176 = vmatprep.subr.bf16.mxu0 0
    %177 = vmatpush1.bf16.msra.mxu0 %v148
    %178 = vmatprep.subr.bf16.mxu0 0
    %179 = vmatpush2.bf16.msra.mxu0 0
    %180 = vmatprep.subr.bf16.mxu0 0
    %181 = vmatpush2.bf16.msra.mxu0 0
    %182 = vmatprep.subr.bf16.mxu0 0
    %183 = vmatpush2.bf16.msra.mxu0 0
    %184 = vmatprep.subr.bf16.mxu0 0
    %185 = vmatpush2.bf16.msra.mxu0 0
    %186 = vmatprep.subr.bf16.mxu0 0
    %187 = vmatpush2.bf16.msra.mxu0 0
    %188 = vmatprep.subr.bf16.mxu0 0
    %189 = vmatpush2.bf16.msra.mxu0 0
    %190 = vmatprep.subr.bf16.mxu0 0
    %191 = vmatpush2.bf16.msra.mxu0 0
    %192 = vmatprep.subr.bf16.mxu0 0
    %193 = vmatpush2.bf16.msra.mxu0 0
    %194 = vmatprep.mubr.bf16.mxu0 0
    %195 = vmatmul.mubr.bf16.gmra.mxu0 %v157
    %v196 = vpop.f32.mrf.mxu0
    %v197 = vadd.f32 0.0, %v196
    %v198 = vpop.f32.mrf.mxu0
    %v199 = vpop.f32.mrf.mxu0
    %v200 = vadd.f32 0.0, %v199
    %v201 = vpop.f32.mrf.mxu0
    %202 = vmatprep.mubr.bf16.mxu0 0
    %203 = vmatmul.mubr.bf16.gmra.mxu0 %v160
    %v204 = vpop.f32.mrf.mxu0
    %v205 = vadd.f32 0.0, %v204
    %v206 = vpop.f32.mrf.mxu0
    %v207 = vpop.f32.mrf.mxu0
    %v208 = vadd.f32 0.0, %v207
    %v209 = vpop.f32.mrf.mxu0
    %210 = vdwg.mxu0
    %v219 = vunpack.c.l.b16 %v109
    %v220 = vunpack.c.l.b16 %v110
    %v221 = vunpack.c.l.b16 %v111
    %v222 = vunpack.c.l.b16 %v112
    %v223 = vunpack.c.l.b16 %v113
    %v224 = vunpack.c.l.b16 %v114
    %v225 = vunpack.c.l.b16 %v115
    %v226 = vunpack.c.l.b16 %v116
    %v227 = vpack.c.b16 %v220, %v219
    %v228 = vpack.c.b16 %v222, %v221
    %v229 = vpack.c.b16 %v224, %v223
    %v230 = vpack.c.b16 %v226, %v225
    %v236 = vsel %vm98, %v107, 0
    %v239 = vsel %vm98, %v108, 0
    %241 = vmatprep.subr.bf16.mxu0 0
    %242 = vmatpush1.bf16.msra.mxu0 0
    %243 = vmatprep.subr.bf16.mxu0 0
    %244 = vmatpush1.bf16.msra.mxu0 0
    %245 = vmatprep.subr.bf16.mxu0 0
    %246 = vmatpush1.bf16.msra.mxu0 0
    %247 = vmatprep.subr.bf16.mxu0 0
    %248 = vmatpush1.bf16.msra.mxu0 0
    %249 = vmatprep.subr.bf16.mxu0 0
    %250 = vmatpush1.bf16.msra.mxu0 %v230
    %251 = vmatprep.subr.bf16.mxu0 0
    %252 = vmatpush1.bf16.msra.mxu0 %v229
    %253 = vmatprep.subr.bf16.mxu0 0
    %254 = vmatpush1.bf16.msra.mxu0 %v228
    %255 = vmatprep.subr.bf16.mxu0 0
    %256 = vmatpush1.bf16.msra.mxu0 %v227
    %257 = vmatprep.subr.bf16.mxu0 0
    %258 = vmatpush2.bf16.msra.mxu0 0
    %259 = vmatprep.subr.bf16.mxu0 0
    %260 = vmatpush2.bf16.msra.mxu0 0
    %261 = vmatprep.subr.bf16.mxu0 0
    %262 = vmatpush2.bf16.msra.mxu0 0
    %263 = vmatprep.subr.bf16.mxu0 0
    %264 = vmatpush2.bf16.msra.mxu0 0
    %265 = vmatprep.subr.bf16.mxu0 0
    %266 = vmatpush2.bf16.msra.mxu0 0
    %267 = vmatprep.subr.bf16.mxu0 0
    %268 = vmatpush2.bf16.msra.mxu0 0
    %269 = vmatprep.subr.bf16.mxu0 0
    %270 = vmatpush2.bf16.msra.mxu0 0
    %271 = vmatprep.subr.bf16.mxu0 0
    %272 = vmatpush2.bf16.msra.mxu0 0
    %273 = vmatprep.mubr.bf16.mxu0 0
    %274 = vmatmul.mubr.bf16.gmra.mxu0 %v236
    %v275 = vpop.f32.mrf.mxu0
    %v276 = vadd.f32 %v197, %v275
    %v277 = vpop.f32.mrf.mxu0
    %v278 = vpop.f32.mrf.mxu0
    %v279 = vadd.f32 %v200, %v278
    %v280 = vpop.f32.mrf.mxu0
    %281 = vmatprep.mubr.bf16.mxu0 0
    %282 = vmatmul.mubr.bf16.gmra.mxu0 %v239
    %v283 = vpop.f32.mrf.mxu0
    %v284 = vadd.f32 %v205, %v283
    %v285 = vpop.f32.mrf.mxu0
    %v286 = vpop.f32.mrf.mxu0
    %v287 = vadd.f32 %v208, %v286
    %v288 = vpop.f32.mrf.mxu0
    %289 = vdwg.mxu0
    %v290 = vld [vmem:[#allocation2 + $0x2] sm:$0xff]
    %v291 = vld [vmem:[#allocation2 + $0xa] sm:$0xff]
    %v292 = vld [vmem:[#allocation2 + $0x1a] sm:$0xff]
    %v293 = vld [vmem:[#allocation2 + $0x22] sm:$0xff]
    %v294 = vpack.c.bf16 %v291, %v290
    %v295 = vpack.c.bf16 %v293, %v292
    %s296 = scalar_lea.vmem [#allocation7], 64
    %v297 = vld [vmem:[%s296] sm:$0xf]
    %v298 = vld [vmem:[%s296 + $0x4] sm:$0xf]
    %v299 = vld [vmem:[%s296 + $0x8] sm:$0xf]
    %v300 = vld [vmem:[%s296 + $0xc] sm:$0xf]
    %v301 = vld [vmem:[%s296 + $0x10] sm:$0xf]
    %v302 = vld [vmem:[%s296 + $0x14] sm:$0xf]
    %v303 = vld [vmem:[%s296 + $0x18] sm:$0xf]
    %v304 = vld [vmem:[%s296 + $0x1c] sm:$0xf]
    %v313 = vunpack.c.l.b16 %v297
    %v314 = vunpack.c.l.b16 %v298
    %v315 = vunpack.c.l.b16 %v299
    %v316 = vunpack.c.l.b16 %v300
    %v317 = vunpack.c.l.b16 %v301
    %v318 = vunpack.c.l.b16 %v302
    %v319 = vunpack.c.l.b16 %v303
    %v320 = vunpack.c.l.b16 %v304
    %v321 = vpack.c.b16 %v314, %v313
    %v322 = vpack.c.b16 %v316, %v315
    %v323 = vpack.c.b16 %v318, %v317
    %v324 = vpack.c.b16 %v320, %v319
    %v330 = vsel %vm98, %v294, 0
    %v333 = vsel %vm98, %v295, 0
    %335 = vmatprep.subr.bf16.mxu0 0
    %336 = vmatpush1.bf16.msra.mxu0 0
    %337 = vmatprep.subr.bf16.mxu0 0
    %338 = vmatpush1.bf16.msra.mxu0 0
    %339 = vmatprep.subr.bf16.mxu0 0
    %340 = vmatpush1.bf16.msra.mxu0 0
    %341 = vmatprep.subr.bf16.mxu0 0
    %342 = vmatpush1.bf16.msra.mxu0 0
    %343 = vmatprep.subr.bf16.mxu0 0
    %344 = vmatpush1.bf16.msra.mxu0 %v324
    %345 = vmatprep.subr.bf16.mxu0 0
    %346 = vmatpush1.bf16.msra.mxu0 %v323
    %347 = vmatprep.subr.bf16.mxu0 0
    %348 = vmatpush1.bf16.msra.mxu0 %v322
    %349 = vmatprep.subr.bf16.mxu0 0
    %350 = vmatpush1.bf16.msra.mxu0 %v321
    %351 = vmatprep.subr.bf16.mxu0 0
    %352 = vmatpush2.bf16.msra.mxu0 0
    %353 = vmatprep.subr.bf16.mxu0 0
    %354 = vmatpush2.bf16.msra.mxu0 0
    %355 = vmatprep.subr.bf16.mxu0 0
    %356 = vmatpush2.bf16.msra.mxu0 0
    %357 = vmatprep.subr.bf16.mxu0 0
    %358 = vmatpush2.bf16.msra.mxu0 0
    %359 = vmatprep.subr.bf16.mxu0 0
    %360 = vmatpush2.bf16.msra.mxu0 0
    %361 = vmatprep.subr.bf16.mxu0 0
    %362 = vmatpush2.bf16.msra.mxu0 0
    %363 = vmatprep.subr.bf16.mxu0 0
    %364 = vmatpush2.bf16.msra.mxu0 0
    %365 = vmatprep.subr.bf16.mxu0 0
    %366 = vmatpush2.bf16.msra.mxu0 0
    %367 = vmatprep.mubr.bf16.mxu0 0
    %368 = vmatmul.mubr.bf16.gmra.mxu0 %v330
    %v369 = vpop.f32.mrf.mxu0
    %v370 = vadd.f32 0.0, %v369
    %v371 = vpop.f32.mrf.mxu0
    %v372 = vpop.f32.mrf.mxu0
    %v373 = vadd.f32 0.0, %v372
    %v374 = vpop.f32.mrf.mxu0
    %375 = vmatprep.mubr.bf16.mxu0 0
    %376 = vmatmul.mubr.bf16.gmra.mxu0 %v333
    %v377 = vpop.f32.mrf.mxu0
    %v378 = vadd.f32 0.0, %v377
    %v379 = vpop.f32.mrf.mxu0
    %v380 = vpop.f32.mrf.mxu0
    %v381 = vadd.f32 0.0, %v380
    %v382 = vpop.f32.mrf.mxu0
    %383 = vdwg.mxu0
    %v384 = vadd.f32 %v276, %v370
    %v385 = vadd.f32 %v279, %v373
    %v386 = vadd.f32 %v284, %v378
    %v387 = vadd.f32 %v287, %v381
    %v388 = vld [vmem:[%s5] sm:$0x1]
    %v390 = vlaneseq
    %v391 = vshrl.u32 %v390, 7
    %v392 = vsub.s32 0, %v391
    %v393 = vrot.slane %v388, %v392
    %v395 = vmul.f32 %v384, %v393
    %v396 = vmul.f32 %v385, %v393
    %v397 = vmul.f32 %v386, %v393
    %v398 = vmul.f32 %v387, %v393
    %v399 = vld [vmem:[%s6] sm:$0x1]
    %v401 = vlaneseq
    %v402 = vshrl.u32 %v401, 7
    %v403 = vsub.s32 0, %v402
    %v404 = vrot.slane %v399, %v403
    %v406 = vadd.f32 %v395, %v404
    %v407 = vadd.f32 %v396, %v404
    %v408 = vadd.f32 %v397, %v404
    %v409 = vadd.f32 %v398, %v404
    %v410 = vmax.f32 %v406, 0.0
    %v411 = vmax.f32 %v407, 0.0
    %v412 = vmax.f32 %v408, 0.0
    %v413 = vmax.f32 %v409, 0.0
    %414 = vst [vmem:[#allocation3] sm:$0x1] 0.0
    %415 = vst [vmem:[#allocation3 + $0x18] sm:$0x1] 0.0
    %416 = vst [vmem:[#allocation3 + $0x11] sm:$0x1] 0.0
    %417 = vst [vmem:[#allocation3 + $0x29] sm:$0x1] 0.0
    %418 = vst [vmem:[#allocation3 + $0x1] sm:$0xff] %v410
    %419 = vst [vmem:[#allocation3 + $0x9] sm:$0xff] %v411
    %420 = vst [vmem:[#allocation3 + $0x19] sm:$0xff] %v412
    %421 = vst [vmem:[#allocation3 + $0x21] sm:$0xff] %v413
    %v422 = vld [vmem:[#allocation3] sm:$0xff]
    %v423 = vld [vmem:[#allocation3 + $0x8] sm:$0xff]
    %v424 = vld [vmem:[#allocation3 + $0x18] sm:$0xff]
    %v425 = vld [vmem:[#allocation3 + $0x20] sm:$0xff]
    %v426 = vpack.c.bf16 %v423, %v422
    %v427 = vpack.c.bf16 %v425, %v424
    %v428 = vld [vmem:[#allocation9] sm:$0xf]
    %v429 = vld [vmem:[#allocation9 + $0x4] sm:$0xf]
    %v430 = vld [vmem:[#allocation9 + $0x8] sm:$0xf]
    %v431 = vld [vmem:[#allocation9 + $0xc] sm:$0xf]
    %v432 = vld [vmem:[#allocation9 + $0x10] sm:$0xf]
    %v433 = vld [vmem:[#allocation9 + $0x14] sm:$0xf]
    %v434 = vld [vmem:[#allocation9 + $0x18] sm:$0xf]
    %v435 = vld [vmem:[#allocation9 + $0x1c] sm:$0xf]
    %v436 = vld [vmem:[#allocation9 + $0x20] sm:$0xf]
    %v437 = vld [vmem:[#allocation9 + $0x24] sm:$0xf]
    %v438 = vld [vmem:[#allocation9 + $0x28] sm:$0xf]
    %v439 = vld [vmem:[#allocation9 + $0x2c] sm:$0xf]
    %v440 = vld [vmem:[#allocation9 + $0x30] sm:$0xf]
    %v441 = vld [vmem:[#allocation9 + $0x34] sm:$0xf]
    %v442 = vld [vmem:[#allocation9 + $0x38] sm:$0xf]
    %v443 = vld [vmem:[#allocation9 + $0x3c] sm:$0xf]
    %v444 = vld [vmem:[#allocation3 + $0x1] sm:$0xff]
    %v445 = vld [vmem:[#allocation3 + $0x9] sm:$0xff]
    %v446 = vld [vmem:[#allocation3 + $0x19] sm:$0xff]
    %v447 = vld [vmem:[#allocation3 + $0x21] sm:$0xff]
    %v448 = vpack.c.bf16 %v445, %v444
    %v449 = vpack.c.bf16 %v447, %v446
    %s450 = scalar_lea.vmem [#allocation9], 64
    %v451 = vld [vmem:[%s450] sm:$0xf]
    %v452 = vld [vmem:[%s450 + $0x4] sm:$0xf]
    %v453 = vld [vmem:[%s450 + $0x8] sm:$0xf]
    %v454 = vld [vmem:[%s450 + $0xc] sm:$0xf]
    %v455 = vld [vmem:[%s450 + $0x10] sm:$0xf]
    %v456 = vld [vmem:[%s450 + $0x14] sm:$0xf]
    %v457 = vld [vmem:[%s450 + $0x18] sm:$0xf]
    %v458 = vld [vmem:[%s450 + $0x1c] sm:$0xf]
    %v459 = vld [vmem:[%s450 + $0x20] sm:$0xf]
    %v460 = vld [vmem:[%s450 + $0x24] sm:$0xf]
    %v461 = vld [vmem:[%s450 + $0x28] sm:$0xf]
    %v462 = vld [vmem:[%s450 + $0x2c] sm:$0xf]
    %v463 = vld [vmem:[%s450 + $0x30] sm:$0xf]
    %v464 = vld [vmem:[%s450 + $0x34] sm:$0xf]
    %v465 = vld [vmem:[%s450 + $0x38] sm:$0xf]
    %v466 = vld [vmem:[%s450 + $0x3c] sm:$0xf]
    %v483 = vunpack.c.l.b16 %v451
    %v484 = vunpack.c.l.b16 %v452
    %v485 = vunpack.c.l.b16 %v453
    %v486 = vunpack.c.l.b16 %v454
    %v487 = vunpack.c.l.b16 %v455
    %v488 = vunpack.c.l.b16 %v456
    %v489 = vunpack.c.l.b16 %v457
    %v490 = vunpack.c.l.b16 %v458
    %v491 = vunpack.c.l.b16 %v459
    %v492 = vunpack.c.l.b16 %v460
    %v493 = vunpack.c.l.b16 %v461
    %v494 = vunpack.c.l.b16 %v462
    %v495 = vunpack.c.l.b16 %v463
    %v496 = vunpack.c.l.b16 %v464
    %v497 = vunpack.c.l.b16 %v465
    %v498 = vunpack.c.l.b16 %v466
    %v499 = vpack.c.b16 %v484, %v483
    %v500 = vpack.c.b16 %v486, %v485
    %v501 = vpack.c.b16 %v488, %v487
    %v502 = vpack.c.b16 %v490, %v489
    %v503 = vpack.c.b16 %v492, %v491
    %v504 = vpack.c.b16 %v494, %v493
    %v505 = vpack.c.b16 %v496, %v495
    %v506 = vpack.c.b16 %v498, %v497
    %515 = vmatprep.subr.bf16.mxu0 0
    %516 = vmatpush1.bf16.msra.mxu0 %v506
    %517 = vmatprep.subr.bf16.mxu0 0
    %518 = vmatpush1.bf16.msra.mxu0 %v505
    %519 = vmatprep.subr.bf16.mxu0 0
    %520 = vmatpush1.bf16.msra.mxu0 %v504
    %521 = vmatprep.subr.bf16.mxu0 0
    %522 = vmatpush1.bf16.msra.mxu0 %v503
    %523 = vmatprep.subr.bf16.mxu0 0
    %524 = vmatpush1.bf16.msra.mxu0 %v502
    %525 = vmatprep.subr.bf16.mxu0 0
    %526 = vmatpush1.bf16.msra.mxu0 %v501
    %527 = vmatprep.subr.bf16.mxu0 0
    %528 = vmatpush1.bf16.msra.mxu0 %v500
    %529 = vmatprep.subr.bf16.mxu0 0
    %530 = vmatpush1.bf16.msra.mxu0 %v499
    %531 = vmatprep.subr.bf16.mxu0 0
    %532 = vmatpush2.bf16.msra.mxu0 0
    %533 = vmatprep.subr.bf16.mxu0 0
    %534 = vmatpush2.bf16.msra.mxu0 0
    %535 = vmatprep.subr.bf16.mxu0 0
    %536 = vmatpush2.bf16.msra.mxu0 0
    %537 = vmatprep.subr.bf16.mxu0 0
    %538 = vmatpush2.bf16.msra.mxu0 0
    %539 = vmatprep.subr.bf16.mxu0 0
    %540 = vmatpush2.bf16.msra.mxu0 0
    %541 = vmatprep.subr.bf16.mxu0 0
    %542 = vmatpush2.bf16.msra.mxu0 0
    %543 = vmatprep.subr.bf16.mxu0 0
    %544 = vmatpush2.bf16.msra.mxu0 0
    %545 = vmatprep.subr.bf16.mxu0 0
    %546 = vmatpush2.bf16.msra.mxu0 0
    %547 = vmatprep.mubr.bf16.mxu0 0
    %548 = vmatmul.mubr.bf16.gmra.mxu0 %v448
    %v549 = vpop.f32.mrf.mxu0
    %v550 = vadd.f32 0.0, %v549
    %v551 = vpop.f32.mrf.mxu0
    %v552 = vpop.f32.mrf.mxu0
    %v553 = vadd.f32 0.0, %v552
    %v554 = vpop.f32.mrf.mxu0
    %555 = vmatprep.mubr.bf16.mxu0 0
    %556 = vmatmul.mubr.bf16.gmra.mxu0 %v449
    %v557 = vpop.f32.mrf.mxu0
    %v558 = vadd.f32 0.0, %v557
    %v559 = vpop.f32.mrf.mxu0
    %v560 = vpop.f32.mrf.mxu0
    %v561 = vadd.f32 0.0, %v560
    %v562 = vpop.f32.mrf.mxu0
    %563 = vdwg.mxu0
    %v580 = vunpack.c.l.b16 %v428
    %v581 = vunpack.c.l.b16 %v429
    %v582 = vunpack.c.l.b16 %v430
    %v583 = vunpack.c.l.b16 %v431
    %v584 = vunpack.c.l.b16 %v432
    %v585 = vunpack.c.l.b16 %v433
    %v586 = vunpack.c.l.b16 %v434
    %v587 = vunpack.c.l.b16 %v435
    %v588 = vunpack.c.l.b16 %v436
    %v589 = vunpack.c.l.b16 %v437
    %v590 = vunpack.c.l.b16 %v438
    %v591 = vunpack.c.l.b16 %v439
    %v592 = vunpack.c.l.b16 %v440
    %v593 = vunpack.c.l.b16 %v441
    %v594 = vunpack.c.l.b16 %v442
    %v595 = vunpack.c.l.b16 %v443
    %v596 = vpack.c.b16 %v581, %v580
    %v597 = vpack.c.b16 %v583, %v582
    %v598 = vpack.c.b16 %v585, %v584
    %v599 = vpack.c.b16 %v587, %v586
    %v600 = vpack.c.b16 %v589, %v588
    %v601 = vpack.c.b16 %v591, %v590
    %v602 = vpack.c.b16 %v593, %v592
    %v603 = vpack.c.b16 %v595, %v594
    %612 = vmatprep.subr.bf16.mxu0 0
    %613 = vmatpush1.bf16.msra.mxu0 %v603
    %614 = vmatprep.subr.bf16.mxu0 0
    %615 = vmatpush1.bf16.msra.mxu0 %v602
    %616 = vmatprep.subr.bf16.mxu0 0
    %617 = vmatpush1.bf16.msra.mxu0 %v601
    %618 = vmatprep.subr.bf16.mxu0 0
    %619 = vmatpush1.bf16.msra.mxu0 %v600
    %620 = vmatprep.subr.bf16.mxu0 0
    %621 = vmatpush1.bf16.msra.mxu0 %v599
    %622 = vmatprep.subr.bf16.mxu0 0
    %623 = vmatpush1.bf16.msra.mxu0 %v598
    %624 = vmatprep.subr.bf16.mxu0 0
    %625 = vmatpush1.bf16.msra.mxu0 %v597
    %626 = vmatprep.subr.bf16.mxu0 0
    %627 = vmatpush1.bf16.msra.mxu0 %v596
    %628 = vmatprep.subr.bf16.mxu0 0
    %629 = vmatpush2.bf16.msra.mxu0 0
    %630 = vmatprep.subr.bf16.mxu0 0
    %631 = vmatpush2.bf16.msra.mxu0 0
    %632 = vmatprep.subr.bf16.mxu0 0
    %633 = vmatpush2.bf16.msra.mxu0 0
    %634 = vmatprep.subr.bf16.mxu0 0
    %635 = vmatpush2.bf16.msra.mxu0 0
    %636 = vmatprep.subr.bf16.mxu0 0
    %637 = vmatpush2.bf16.msra.mxu0 0
    %638 = vmatprep.subr.bf16.mxu0 0
    %639 = vmatpush2.bf16.msra.mxu0 0
    %640 = vmatprep.subr.bf16.mxu0 0
    %641 = vmatpush2.bf16.msra.mxu0 0
    %642 = vmatprep.subr.bf16.mxu0 0
    %643 = vmatpush2.bf16.msra.mxu0 0
    %644 = vmatprep.mubr.bf16.mxu0 0
    %645 = vmatmul.mubr.bf16.gmra.mxu0 %v426
    %v646 = vpop.f32.mrf.mxu0
    %v647 = vadd.f32 %v550, %v646
    %v648 = vpop.f32.mrf.mxu0
    %v649 = vpop.f32.mrf.mxu0
    %v650 = vadd.f32 %v553, %v649
    %v651 = vpop.f32.mrf.mxu0
    %652 = vmatprep.mubr.bf16.mxu0 0
    %653 = vmatmul.mubr.bf16.gmra.mxu0 %v427
    %v654 = vpop.f32.mrf.mxu0
    %v655 = vadd.f32 %v558, %v654
    %v656 = vpop.f32.mrf.mxu0
    %v657 = vpop.f32.mrf.mxu0
    %v658 = vadd.f32 %v561, %v657
    %v659 = vpop.f32.mrf.mxu0
    %660 = vdwg.mxu0
    %v661 = vld [vmem:[#allocation3 + $0x2] sm:$0xff]
    %v662 = vld [vmem:[#allocation3 + $0xa] sm:$0xff]
    %v663 = vld [vmem:[#allocation3 + $0x1a] sm:$0xff]
    %v664 = vld [vmem:[#allocation3 + $0x22] sm:$0xff]
    %v665 = vpack.c.bf16 %v662, %v661
    %v666 = vpack.c.bf16 %v664, %v663
    %s667 = scalar_lea.vmem [#allocation9], 128
    %v668 = vld [vmem:[%s667] sm:$0xf]
    %v669 = vld [vmem:[%s667 + $0x4] sm:$0xf]
    %v670 = vld [vmem:[%s667 + $0x8] sm:$0xf]
    %v671 = vld [vmem:[%s667 + $0xc] sm:$0xf]
    %v672 = vld [vmem:[%s667 + $0x10] sm:$0xf]
    %v673 = vld [vmem:[%s667 + $0x14] sm:$0xf]
    %v674 = vld [vmem:[%s667 + $0x18] sm:$0xf]
    %v675 = vld [vmem:[%s667 + $0x1c] sm:$0xf]
    %v676 = vld [vmem:[%s667 + $0x20] sm:$0xf]
    %v677 = vld [vmem:[%s667 + $0x24] sm:$0xf]
    %v678 = vld [vmem:[%s667 + $0x28] sm:$0xf]
    %v679 = vld [vmem:[%s667 + $0x2c] sm:$0xf]
    %v680 = vld [vmem:[%s667 + $0x30] sm:$0xf]
    %v681 = vld [vmem:[%s667 + $0x34] sm:$0xf]
    %v682 = vld [vmem:[%s667 + $0x38] sm:$0xf]
    %v683 = vld [vmem:[%s667 + $0x3c] sm:$0xf]
    %v700 = vunpack.c.l.b16 %v668
    %v701 = vunpack.c.l.b16 %v669
    %v702 = vunpack.c.l.b16 %v670
    %v703 = vunpack.c.l.b16 %v671
    %v704 = vunpack.c.l.b16 %v672
    %v705 = vunpack.c.l.b16 %v673
    %v706 = vunpack.c.l.b16 %v674
    %v707 = vunpack.c.l.b16 %v675
    %v708 = vunpack.c.l.b16 %v676
    %v709 = vunpack.c.l.b16 %v677
    %v710 = vunpack.c.l.b16 %v678
    %v711 = vunpack.c.l.b16 %v679
    %v712 = vunpack.c.l.b16 %v680
    %v713 = vunpack.c.l.b16 %v681
    %v714 = vunpack.c.l.b16 %v682
    %v715 = vunpack.c.l.b16 %v683
    %v716 = vpack.c.b16 %v701, %v700
    %v717 = vpack.c.b16 %v703, %v702
    %v718 = vpack.c.b16 %v705, %v704
    %v719 = vpack.c.b16 %v707, %v706
    %v720 = vpack.c.b16 %v709, %v708
    %v721 = vpack.c.b16 %v711, %v710
    %v722 = vpack.c.b16 %v713, %v712
    %v723 = vpack.c.b16 %v715, %v714
    %732 = vmatprep.subr.bf16.mxu0 0
    %733 = vmatpush1.bf16.msra.mxu0 %v723
    %734 = vmatprep.subr.bf16.mxu0 0
    %735 = vmatpush1.bf16.msra.mxu0 %v722
    %736 = vmatprep.subr.bf16.mxu0 0
    %737 = vmatpush1.bf16.msra.mxu0 %v721
    %738 = vmatprep.subr.bf16.mxu0 0
    %739 = vmatpush1.bf16.msra.mxu0 %v720
    %740 = vmatprep.subr.bf16.mxu0 0
    %741 = vmatpush1.bf16.msra.mxu0 %v719
    %742 = vmatprep.subr.bf16.mxu0 0
    %743 = vmatpush1.bf16.msra.mxu0 %v718
    %744 = vmatprep.subr.bf16.mxu0 0
    %745 = vmatpush1.bf16.msra.mxu0 %v717
    %746 = vmatprep.subr.bf16.mxu0 0
    %747 = vmatpush1.bf16.msra.mxu0 %v716
    %748 = vmatprep.subr.bf16.mxu0 0
    %749 = vmatpush2.bf16.msra.mxu0 0
    %750 = vmatprep.subr.bf16.mxu0 0
    %751 = vmatpush2.bf16.msra.mxu0 0
    %752 = vmatprep.subr.bf16.mxu0 0
    %753 = vmatpush2.bf16.msra.mxu0 0
    %754 = vmatprep.subr.bf16.mxu0 0
    %755 = vmatpush2.bf16.msra.mxu0 0
    %756 = vmatprep.subr.bf16.mxu0 0
    %757 = vmatpush2.bf16.msra.mxu0 0
    %758 = vmatprep.subr.bf16.mxu0 0
    %759 = vmatpush2.bf16.msra.mxu0 0
    %760 = vmatprep.subr.bf16.mxu0 0
    %761 = vmatpush2.bf16.msra.mxu0 0
    %762 = vmatprep.subr.bf16.mxu0 0
    %763 = vmatpush2.bf16.msra.mxu0 0
    %764 = vmatprep.mubr.bf16.mxu0 0
    %765 = vmatmul.mubr.bf16.gmra.mxu0 %v665
    %v766 = vpop.f32.mrf.mxu0
    %v767 = vadd.f32 0.0, %v766
    %v768 = vpop.f32.mrf.mxu0
    %v769 = vpop.f32.mrf.mxu0
    %v770 = vadd.f32 0.0, %v769
    %v771 = vpop.f32.mrf.mxu0
    %772 = vmatprep.mubr.bf16.mxu0 0
    %773 = vmatmul.mubr.bf16.gmra.mxu0 %v666
    %v774 = vpop.f32.mrf.mxu0
    %v775 = vadd.f32 0.0, %v774
    %v776 = vpop.f32.mrf.mxu0
    %v777 = vpop.f32.mrf.mxu0
    %v778 = vadd.f32 0.0, %v777
    %v779 = vpop.f32.mrf.mxu0
    %780 = vdwg.mxu0
    %v781 = vadd.f32 %v647, %v767
    %v782 = vadd.f32 %v650, %v770
    %v783 = vadd.f32 %v655, %v775
    %v784 = vadd.f32 %v658, %v778
    %v785 = vld [vmem:[%s7] sm:$0x1]
    %v787 = vlaneseq
    %v788 = vshrl.u32 %v787, 7
    %v789 = vsub.s32 0, %v788
    %v790 = vrot.slane %v785, %v789
    %v792 = vmul.f32 %v781, %v790
    %v793 = vmul.f32 %v782, %v790
    %v794 = vmul.f32 %v783, %v790
    %v795 = vmul.f32 %v784, %v790
    %v796 = vld [vmem:[%s8] sm:$0x1]
    %v798 = vlaneseq
    %v799 = vshrl.u32 %v798, 7
    %v800 = vsub.s32 0, %v799
    %v801 = vrot.slane %v796, %v800
    %v803 = vadd.f32 %v792, %v801
    %v804 = vadd.f32 %v793, %v801
    %v805 = vadd.f32 %v794, %v801
    %v806 = vadd.f32 %v795, %v801
    %v807 = vpack.c.bf16 %v90, %v89
    %v808 = vpack.c.bf16 %v92, %v91
    %v809 = vld [vmem:[#allocation10] sm:$0xf]
    %v810 = vld [vmem:[#allocation10 + $0x4] sm:$0xf]
    %v811 = vld [vmem:[#allocation10 + $0x8] sm:$0xf]
    %v812 = vld [vmem:[#allocation10 + $0xc] sm:$0xf]
    %v813 = vld [vmem:[#allocation10 + $0x10] sm:$0xf]
    %v814 = vld [vmem:[#allocation10 + $0x14] sm:$0xf]
    %v815 = vld [vmem:[#allocation10 + $0x18] sm:$0xf]
    %v816 = vld [vmem:[#allocation10 + $0x1c] sm:$0xf]
    %v817 = vld [vmem:[%s4] sm:$0x1]
    %v819 = vlaneseq
    %v820 = vshrl.u32 %v819, 7
    %v821 = vsub.s32 0, %v820
    %v822 = vrot.slane %v817, %v821
    %v832 = vunpack.c.l.b16 %v809
    %v833 = vunpack.c.l.b16 %v810
    %v834 = vunpack.c.l.b16 %v811
    %v835 = vunpack.c.l.b16 %v812
    %v836 = vunpack.c.l.b16 %v813
    %v837 = vunpack.c.l.b16 %v814
    %v838 = vunpack.c.l.b16 %v815
    %v839 = vunpack.c.l.b16 %v816
    %v840 = vpack.c.b16 %v833, %v832
    %v841 = vpack.c.b16 %v835, %v834
    %v842 = vpack.c.b16 %v837, %v836
    %v843 = vpack.c.b16 %v839, %v838
    %v849 = vsel %vm98, %v807, 0
    %v852 = vsel %vm98, %v808, 0
    %854 = vmatprep.subr.bf16.mxu0 0
    %855 = vmatpush1.bf16.msra.mxu0 0
    %856 = vmatprep.subr.bf16.mxu0 0
    %857 = vmatpush1.bf16.msra.mxu0 0
    %858 = vmatprep.subr.bf16.mxu0 0
    %859 = vmatpush1.bf16.msra.mxu0 0
    %860 = vmatprep.subr.bf16.mxu0 0
    %861 = vmatpush1.bf16.msra.mxu0 0
    %862 = vmatprep.subr.bf16.mxu0 0
    %863 = vmatpush1.bf16.msra.mxu0 %v843
    %864 = vmatprep.subr.bf16.mxu0 0
    %865 = vmatpush1.bf16.msra.mxu0 %v842
    %866 = vmatprep.subr.bf16.mxu0 0
    %867 = vmatpush1.bf16.msra.mxu0 %v841
    %868 = vmatprep.subr.bf16.mxu0 0
    %869 = vmatpush1.bf16.msra.mxu0 %v840
    %870 = vmatprep.subr.bf16.mxu0 0
    %871 = vmatpush2.bf16.msra.mxu0 0
    %872 = vmatprep.subr.bf16.mxu0 0
    %873 = vmatpush2.bf16.msra.mxu0 0
    %874 = vmatprep.subr.bf16.mxu0 0
    %875 = vmatpush2.bf16.msra.mxu0 0
    %876 = vmatprep.subr.bf16.mxu0 0
    %877 = vmatpush2.bf16.msra.mxu0 0
    %878 = vmatprep.subr.bf16.mxu0 0
    %879 = vmatpush2.bf16.msra.mxu0 0
    %880 = vmatprep.subr.bf16.mxu0 0
    %881 = vmatpush2.bf16.msra.mxu0 0
    %882 = vmatprep.subr.bf16.mxu0 0
    %883 = vmatpush2.bf16.msra.mxu0 0
    %884 = vmatprep.subr.bf16.mxu0 0
    %885 = vmatpush2.bf16.msra.mxu0 0
    %886 = vmatprep.mubr.bf16.mxu0 0
    %887 = vmatmul.mubr.bf16.gmra.mxu0 %v849
    %v888 = vpop.f32.mrf.mxu0
    %v889 = vadd.f32 %v822, %v888
    %v890 = vpop.f32.mrf.mxu0
    %v891 = vpop.f32.mrf.mxu0
    %v892 = vadd.f32 %v822, %v891
    %v893 = vpop.f32.mrf.mxu0
    %894 = vmatprep.mubr.bf16.mxu0 0
    %895 = vmatmul.mubr.bf16.gmra.mxu0 %v852
    %v896 = vpop.f32.mrf.mxu0
    %v897 = vadd.f32 %v822, %v896
    %v898 = vpop.f32.mrf.mxu0
    %v899 = vpop.f32.mrf.mxu0
    %v900 = vadd.f32 %v822, %v899
    %v901 = vpop.f32.mrf.mxu0
    %902 = vdwg.mxu0
    %v903 = vadd.f32 %v803, %v889
    %v904 = vadd.f32 %v804, %v892
    %v905 = vadd.f32 %v805, %v897
    %v906 = vadd.f32 %v806, %v900
    %v907 = vmax.f32 %v903, 0.0
    %v908 = vmax.f32 %v904, 0.0
    %v909 = vmax.f32 %v905, 0.0
    %v910 = vmax.f32 %v906, 0.0
    %911 = vst [vmem:[#allocation12] sm:$0xff] %v907
    %912 = vst [vmem:[#allocation12 + $0x8] sm:$0xff] %v908
    %913 = vst [vmem:[#allocation12 + $0x10] sm:$0xff] %v909
    %914 = vst [vmem:[#allocation12 + $0x18] sm:$0xff] %v910
    // Predicated region
    $region54: #{tpu_custom_call.1} parent=1 // pred_check
      _
    $region55: #{tpu_custom_call.1} parent=1 // pred_check_branch
      %916 = sbr.rel (0) target = $region57
    $region56: #{tpu_custom_call.1} parent=1 // pred_region
      %s918 = ssub.s32 512, 512
      %919 = vsyncadd [#allocation6], %s918
      %s920 = sshll.u32 [#allocation12], 4
      %s921 = int_to_ptr.vmem [resolvable:$true] %s920
      %926 = dma.vmem_to_hbm [thread:$0]  %s921, 512, %s9, [#allocation6], 128, 128, 8
    $region57: #{tpu_custom_call.1} parent=1 // pred_fallthru
      _
    // Predicated region
    $region58: #{tpu_custom_call.1} parent=1 // pred_check
      _
    $region59: #{tpu_custom_call.1} parent=1 // pred_check_branch
      %928 = sbr.rel (0) target = $region61
    $region60: #{tpu_custom_call.1} parent=1 // pred_region
      %929 = dma.done [#allocation6], 512
    $region61: #{tpu_custom_call.1} parent=1 // pred_fallthru
      _
    %930 = vsyncpa [#allocation5], 1
    %931 = vsyncpa [#allocation8], 1
    %932 = vsyncpa [#allocation11], 1
    %933 = vsyncpa [#allocation6], 1

</llo_original>
